<compile_context>
chip_gen: v6e
topology: v6e:2x2x1
jax: 0.10.0
libtpu: 0.0.40
codegen_flags: <defaults>
</compile_context>

<pallas_src>
import jax
import jax.numpy as jnp
from jax.experimental import pallas as pl
from jax.experimental.pallas import tpu as pltpu

_LANE = 128           # TPU lane width
_BLOCK_B = 2048       # batch lanes per grid step (f32 [2,2048]+[1,2048] blocks; tiny vs VMEM)


def _mish(x):
    # mish(x) = x * tanh(softplus(x)) = x * (u^2 + 2u) / (u^2 + 2u + 2), u = exp(x).
    # Guard large x (tanh(softplus(x)) -> 1) and clamp exp input so u^2 cannot overflow.
    u = jnp.exp(jnp.minimum(x, 20.0))
    n = u * (u + 2.0)
    d = n + 2.0
    r = pl.reciprocal(d, approx=True)
    r = r * (2.0 - d * r)            # one Newton-Raphson step -> ~full f32 precision
    return jnp.where(x > 20.0, x, x * n * r)


def xornet_kernel(p_ref, x_ref, o_ref):
    # p_ref: SMEM f32[9] = [w00, w01, w10, w11, b0, b1, v0, v1, c]  (PyTorch row-major W)
    # x_ref: VMEM f32[2, TB]   (features on sublanes, batch on lanes)
    # o_ref: VMEM f32[1, TB]
    x0 = x_ref[0:1, :]
    x1 = x_ref[1:2, :]
    h0 = _mish(x0 * p_ref[0] + x1 * p_ref[1] + p_ref[4])
    h1 = _mish(x0 * p_ref[2] + x1 * p_ref[3] + p_ref[5])
    o_ref[...] = _mish(h0 * p_ref[6] + h1 * p_ref[7] + p_ref[8])


def xornet_forward(x, w1, b1, w2, b2):
    """x: [B, 2]; w1: [2, 2]; b1: [2]; w2: [1, 2]; b2: [1]  (PyTorch nn.Linear layout)."""
    B = x.shape[0]
    # Lane-dense batch tile: multiple of 128, capped at _BLOCK_B.
    tb = min(_BLOCK_B, pl.cdiv(B, _LANE) * _LANE)
    b_pad = pl.cdiv(B, tb) * tb

    xt = jnp.transpose(x).astype(jnp.float32)                   # [2, B]  (layout plumbing in wrapper)
    if b_pad != B:
        xt = jnp.pad(xt, ((0, 0), (0, b_pad - B)))               # [2, B_pad]

    params = jnp.concatenate([
        jnp.reshape(w1, (-1,)), jnp.reshape(b1, (-1,)),
        jnp.reshape(w2, (-1,)), jnp.reshape(b2, (-1,)),
    ]).astype(jnp.float32)                                       # f32[9]

    out = pl.pallas_call(
        xornet_kernel,
        out_shape=jax.ShapeDtypeStruct((1, b_pad), jnp.float32),
        grid=(b_pad // tb,),
        in_specs=[
            pl.BlockSpec(memory_space=pltpu.MemorySpace.SMEM),   # params: whole array in SMEM
            pl.BlockSpec((2, tb), lambda i: (0, i)),             # x tile: batch along lanes
        ],
        out_specs=pl.BlockSpec((1, tb), lambda i: (0, i)),
        compiler_params=pltpu.CompilerParams(
            dimension_semantics=("parallel",)),                  # 2x TC sharding on v7x
    )(params, xt)

    return jnp.transpose(out[:, :B])                             # [B, 1]


def _reference(x, w1, b1, w2, b2):
    def mish(v):
        return v * jnp.tanh(jax.nn.softplus(v))
    h = mish(x @ w1.T + b1)
    return mish(h @ w2.T + b2)


if __name__ == "__main__":
    key = jax.random.PRNGKey(0)
    k_x, k_w1, k_b1, k_w2, k_b2 = jax.random.split(key, 5)

    B = 8
    x = jax.random.normal(k_x, (B, 2), dtype=jnp.float32)

    # nn.Linear default init: U(-1/sqrt(fan_in), 1/sqrt(fan_in)), fan_in = 2.
    bound = 1.0 / jnp.sqrt(2.0)
    w1 = jax.random.uniform(k_w1, (2, 2), jnp.float32, -bound, bound)
    b1 = jax.random.uniform(k_b1, (2,), jnp.float32, -bound, bound)
    w2 = jax.random.uniform(k_w2, (1, 2), jnp.float32, -bound, bound)
    b2 = jax.random.uniform(k_b2, (1,), jnp.float32, -bound, bound)

    out = xornet_forward(x, w1, b1, w2, b2)
    out = jax.block_until_ready(out)

    ref = _reference(x, w1, b1, w2, b2)
    assert out.shape == (B, 1)
    assert jnp.allclose(out, ref, atol=1e-5, rtol=1e-5), (out, ref)

    print("KERNEL_OK")
</pallas_src>

<mosaic_0001>
module attributes {stable_mosaic.version = 11 : i64} {
  func.func @xornet_kernel(%arg0: i32, %arg1: memref<9xf32, #tpu.memory_space<smem>>, %arg2: memref<2x128xf32, #tpu.memory_space<vmem>>, %arg3: memref<1x128xf32, #tpu.memory_space<vmem>>) attributes {dimension_semantics = [#tpu.dimension_semantics<parallel>], iteration_bounds = array<i64: 1>, scalar_prefetch = 0 : i64, scratch_operands = 0 : i64, tpu.core_type = #tpu.core_type<tc>, window_params = [{transform_indices = @transform_0, window_bounds = array<i64: 9>}, {transform_indices = @transform_1, window_bounds = array<i64: 2, 128>}, {transform_indices = @transform_2, window_bounds = array<i64: 1, 128>}]} {
    %c0 = arith.constant 0 : index
    %c0_0 = arith.constant 0 : index
    %0 = vector.load %arg2[%c0, %c0_0] : memref<2x128xf32, #tpu.memory_space<vmem>>, vector<1x128xf32>
    %c1 = arith.constant 1 : index
    %c0_1 = arith.constant 0 : index
    %1 = vector.load %arg2[%c1, %c0_1] : memref<2x128xf32, #tpu.memory_space<vmem>>, vector<1x128xf32>
    %c0_2 = arith.constant 0 : index
    %2 = memref.load %arg1[%c0_2] : memref<9xf32, #tpu.memory_space<smem>>
    %3 = vector.broadcast %2 : f32 to vector<1x128xf32>
    %4 = arith.mulf %0, %3 : vector<1x128xf32>
    %c1_3 = arith.constant 1 : index
    %5 = memref.load %arg1[%c1_3] : memref<9xf32, #tpu.memory_space<smem>>
    %6 = vector.broadcast %5 : f32 to vector<1x128xf32>
    %7 = arith.mulf %1, %6 : vector<1x128xf32>
    %8 = arith.addf %4, %7 : vector<1x128xf32>
    %c4 = arith.constant 4 : index
    %9 = memref.load %arg1[%c4] : memref<9xf32, #tpu.memory_space<smem>>
    %10 = vector.broadcast %9 : f32 to vector<1x128xf32>
    %11 = arith.addf %8, %10 : vector<1x128xf32>
    %cst = arith.constant 2.000000e+01 : f32
    %12 = vector.broadcast %cst : f32 to vector<1x128xf32>
    %13 = arith.minimumf %11, %12 : vector<1x128xf32>
    %14 = math.exp %13 : vector<1x128xf32>
    %cst_4 = arith.constant 2.000000e+00 : f32
    %15 = vector.broadcast %cst_4 : f32 to vector<1x128xf32>
    %16 = arith.addf %14, %15 : vector<1x128xf32>
    %17 = arith.mulf %14, %16 : vector<1x128xf32>
    %cst_5 = arith.constant 2.000000e+00 : f32
    %18 = vector.broadcast %cst_5 : f32 to vector<1x128xf32>
    %19 = arith.addf %17, %18 : vector<1x128xf32>
    %20 = tpu.reciprocal %19 {approx = true} : vector<1x128xf32> -> vector<1x128xf32>
    %21 = arith.mulf %19, %20 : vector<1x128xf32>
    %cst_6 = arith.constant 2.000000e+00 : f32
    %22 = vector.broadcast %cst_6 : f32 to vector<1x128xf32>
    %23 = arith.subf %22, %21 : vector<1x128xf32>
    %24 = arith.mulf %20, %23 : vector<1x128xf32>
    %cst_7 = arith.constant 2.000000e+01 : f32
    %25 = vector.broadcast %cst_7 : f32 to vector<1x128xf32>
    %26 = arith.cmpf ogt, %11, %25 : vector<1x128xf32>
    %27 = arith.mulf %11, %17 : vector<1x128xf32>
    %28 = arith.mulf %27, %24 : vector<1x128xf32>
    %29 = arith.select %26, %11, %28 : vector<1x128xi1>, vector<1x128xf32>
    %c2 = arith.constant 2 : index
    %30 = memref.load %arg1[%c2] : memref<9xf32, #tpu.memory_space<smem>>
    %31 = vector.broadcast %30 : f32 to vector<1x128xf32>
    %32 = arith.mulf %0, %31 : vector<1x128xf32>
    %c3 = arith.constant 3 : index
    %33 = memref.load %arg1[%c3] : memref<9xf32, #tpu.memory_space<smem>>
    %34 = vector.broadcast %33 : f32 to vector<1x128xf32>
    %35 = arith.mulf %1, %34 : vector<1x128xf32>
    %36 = arith.addf %32, %35 : vector<1x128xf32>
    %c5 = arith.constant 5 : index
    %37 = memref.load %arg1[%c5] : memref<9xf32, #tpu.memory_space<smem>>
    %38 = vector.broadcast %37 : f32 to vector<1x128xf32>
    %39 = arith.addf %36, %38 : vector<1x128xf32>
    %cst_8 = arith.constant 2.000000e+01 : f32
    %40 = vector.broadcast %cst_8 : f32 to vector<1x128xf32>
    %41 = arith.minimumf %39, %40 : vector<1x128xf32>
    %42 = math.exp %41 : vector<1x128xf32>
    %cst_9 = arith.constant 2.000000e+00 : f32
    %43 = vector.broadcast %cst_9 : f32 to vector<1x128xf32>
    %44 = arith.addf %42, %43 : vector<1x128xf32>
    %45 = arith.mulf %42, %44 : vector<1x128xf32>
    %cst_10 = arith.constant 2.000000e+00 : f32
    %46 = vector.broadcast %cst_10 : f32 to vector<1x128xf32>
    %47 = arith.addf %45, %46 : vector<1x128xf32>
    %48 = tpu.reciprocal %47 {approx = true} : vector<1x128xf32> -> vector<1x128xf32>
    %49 = arith.mulf %47, %48 : vector<1x128xf32>
    %cst_11 = arith.constant 2.000000e+00 : f32
    %50 = vector.broadcast %cst_11 : f32 to vector<1x128xf32>
    %51 = arith.subf %50, %49 : vector<1x128xf32>
    %52 = arith.mulf %48, %51 : vector<1x128xf32>
    %cst_12 = arith.constant 2.000000e+01 : f32
    %53 = vector.broadcast %cst_12 : f32 to vector<1x128xf32>
    %54 = arith.cmpf ogt, %39, %53 : vector<1x128xf32>
    %55 = arith.mulf %39, %45 : vector<1x128xf32>
    %56 = arith.mulf %55, %52 : vector<1x128xf32>
    %57 = arith.select %54, %39, %56 : vector<1x128xi1>, vector<1x128xf32>
    %c6 = arith.constant 6 : index
    %58 = memref.load %arg1[%c6] : memref<9xf32, #tpu.memory_space<smem>>
    %59 = vector.broadcast %58 : f32 to vector<1x128xf32>
    %60 = arith.mulf %29, %59 : vector<1x128xf32>
    %c7 = arith.constant 7 : index
    %61 = memref.load %arg1[%c7] : memref<9xf32, #tpu.memory_space<smem>>
    %62 = vector.broadcast %61 : f32 to vector<1x128xf32>
    %63 = arith.mulf %57, %62 : vector<1x128xf32>
    %64 = arith.addf %60, %63 : vector<1x128xf32>
    %c8 = arith.constant 8 : index
    %65 = memref.load %arg1[%c8] : memref<9xf32, #tpu.memory_space<smem>>
    %66 = vector.broadcast %65 : f32 to vector<1x128xf32>
    %67 = arith.addf %64, %66 : vector<1x128xf32>
    %cst_13 = arith.constant 2.000000e+01 : f32
    %68 = vector.broadcast %cst_13 : f32 to vector<1x128xf32>
    %69 = arith.minimumf %67, %68 : vector<1x128xf32>
    %70 = math.exp %69 : vector<1x128xf32>
    %cst_14 = arith.constant 2.000000e+00 : f32
    %71 = vector.broadcast %cst_14 : f32 to vector<1x128xf32>
    %72 = arith.addf %70, %71 : vector<1x128xf32>
    %73 = arith.mulf %70, %72 : vector<1x128xf32>
    %cst_15 = arith.constant 2.000000e+00 : f32
    %74 = vector.broadcast %cst_15 : f32 to vector<1x128xf32>
    %75 = arith.addf %73, %74 : vector<1x128xf32>
    %76 = tpu.reciprocal %75 {approx = true} : vector<1x128xf32> -> vector<1x128xf32>
    %77 = arith.mulf %75, %76 : vector<1x128xf32>
    %cst_16 = arith.constant 2.000000e+00 : f32
    %78 = vector.broadcast %cst_16 : f32 to vector<1x128xf32>
    %79 = arith.subf %78, %77 : vector<1x128xf32>
    %80 = arith.mulf %76, %79 : vector<1x128xf32>
    %cst_17 = arith.constant 2.000000e+01 : f32
    %81 = vector.broadcast %cst_17 : f32 to vector<1x128xf32>
    %82 = arith.cmpf ogt, %67, %81 : vector<1x128xf32>
    %83 = arith.mulf %67, %73 : vector<1x128xf32>
    %84 = arith.mulf %83, %80 : vector<1x128xf32>
    %85 = arith.select %82, %67, %84 : vector<1x128xi1>, vector<1x128xf32>
    %c0_18 = arith.constant 0 : index
    %c0_19 = arith.constant 0 : index
    %86 = vector.load %arg3[%c0_18, %c0_19] : memref<1x128xf32, #tpu.memory_space<vmem>>, vector<1x128xf32>
    tpu.vector_store %arg3[%c0_18, %c0_19], %85 {strides = array<i32>} : memref<1x128xf32, #tpu.memory_space<vmem>>, vector<1x128xf32>,
    return
  }
  func.func @transform_0(%arg0: i32) -> i32 {
    %c0_i32 = arith.constant 0 : i32
    %c0_i32_0 = arith.constant 0 : i32
    return %c0_i32 : i32
  }
  func.func @transform_1(%arg0: i32) -> (i32, i32) {
    %c0_i32 = arith.constant 0 : i32
    %c0_i32_0 = arith.constant 0 : i32
    return %c0_i32, %arg0 : i32, i32
  }
  func.func @transform_2(%arg0: i32) -> (i32, i32) {
    %c0_i32 = arith.constant 0 : i32
    %c0_i32_0 = arith.constant 0 : i32
    return %c0_i32, %arg0 : i32, i32
  }
}

</mosaic_0001>

<llo_original>
// kernel: tpu_custom_call.1
$region0: #{tpu_custom_call.1}
  #allocation0 [shape = 'u32[]', space=smem, size = 0x4, offset = 0x4, fixed_abs, tag = 'smem constant byte address 0x4 - core index']
  #allocation1 [shape = 'u32[144,128]{1,0:T(1,128)}', space=vmem, size = 0x12000, scoped, tag = 'internal scratch']
  %s0 = inlined_call_operand.hbm [shape: f32[9], index: 0, kind: input, shape index: {}]
  %s1 = inlined_call_operand.hbm [shape: f32[2,128], index: 1, kind: input, shape index: {}]
  %s2 = inlined_call_operand.hbm [shape: f32[1,128], index: 2, kind: output, shape index: {}]
  %s3 = sld [smem:[#allocation0]]
  $region26: #{tpu_custom_call.1} parent=0
    _
  %s5 = ssub.s32 1, %s3
  %s6 = scalar_select 0, %s5, %s3
  $region1: #{tpu_custom_call.1} parent=0
    #allocation2 [shape = 'u8[512]{0}', space=smem, size = 0x200, scoped, tag = 'input window, operand 0, single buffered']
    #allocation3 [shape = 's32[1]{0}', space=sflag, size = 0x4, scoped, tag = 'scoped memory for tpu_custom_call.1']
    #allocation4 [shape = 's32[1]{0}', space=sflag, size = 0x4, scoped, tag = 'scoped memory for tpu_custom_call.1']
    #allocation5 [shape = 's32[1]{0}', space=sflag, size = 0x4, scoped, tag = 'scoped memory for tpu_custom_call.1']
    #allocation6 [shape = 'u8[1024]{0}', space=vmem, size = 0x400, scoped, tag = 'input window, operand 1, single buffered']
    #allocation7 [shape = 'u8[512]{0}', space=vmem, size = 0x400, scoped, tag = 'output window, operand 0, single buffered']
    %7 = vsyncpa [#allocation5], 0
    %8 = vsyncpa [#allocation3], 0
    %9 = vsyncpa [#allocation4], 0
    // Predicated region
    $region2: #{tpu_custom_call.1} parent=1 // pred_check
      _
    $region3: #{tpu_custom_call.1} parent=1 // pred_check_branch
      %11 = sbr.rel (0) target = $region5
    $region4: #{tpu_custom_call.1} parent=1 // pred_region
      %s13 = ssub.s32 16, 16
      %14 = vsyncadd [#allocation5], %s13
      %17 = dma.hbm_to_smem %s0, 16, [#allocation2], [#allocation5]
    $region5: #{tpu_custom_call.1} parent=1 // pred_fallthru
      _
    // Predicated region
    $region6: #{tpu_custom_call.1} parent=1 // pred_check
      _
    $region7: #{tpu_custom_call.1} parent=1 // pred_check_branch
      %19 = sbr.rel (0) target = $region9
    $region8: #{tpu_custom_call.1} parent=1 // pred_region
      %s21 = ssub.s32 32, 32
      %22 = vsyncadd [#allocation3], %s21
      %s24 = sshll.u32 [#allocation6], 4
      %s25 = int_to_ptr.vmem [resolvable:$true] %s24
      %27 = dma.hbm_to_vmem [thread:$0]  %s1, 32, %s25, [#allocation3]
    $region9: #{tpu_custom_call.1} parent=1 // pred_fallthru
      _
    // Predicated region
    $region10: #{tpu_custom_call.1} parent=1 // pred_check
      _
    $region11: #{tpu_custom_call.1} parent=1 // pred_check_branch
      %29 = sbr.rel (0) target = $region13
    $region12: #{tpu_custom_call.1} parent=1 // pred_region
      %30 = dma.done [#allocation5], 16
    $region13: #{tpu_custom_call.1} parent=1 // pred_fallthru
      _
    // Predicated region
    $region14: #{tpu_custom_call.1} parent=1 // pred_check
      _
    $region15: #{tpu_custom_call.1} parent=1 // pred_check_branch
      %32 = sbr.rel (0) target = $region17
    $region16: #{tpu_custom_call.1} parent=1 // pred_region
      %33 = dma.done [#allocation3], 32
    $region17: #{tpu_custom_call.1} parent=1 // pred_fallthru
      _
    %34 = sfence
    %v35 = vld [vmem:[#allocation6] sm:$0x1]
    %v36 = vld [vmem:[#allocation6 + $0x1] sm:$0x1]
    %s37 = sld [smem:[#allocation2]]
    %v38 = vstv %s37
    %v39 = vmul.f32 %v35, %v38
    %s40 = sld [smem:[#allocation2 + $0x1]]
    %v41 = vstv %s40
    %v42 = vmul.f32 %v36, %v41
    %v43 = vadd.f32 %v39, %v42
    %s44 = sld [smem:[#allocation2 + $0x4]]
    %v45 = vstv %s44
    %v46 = vadd.f32 %v43, %v45
    %v47 = vmin.f32 %v46, 20.0
    %v48 = vmul.f32 %v47, 1.442695
    %v49 = vpow.pop %v48
    %v50 = vadd.f32 %v49, 2.0
    %v51 = vmul.f32 %v49, %v50
    %v52 = vadd.f32 %v51, 2.0
    %v53 = vrcp.pop %v52
    %v54 = vmul.f32 %v52, %v53
    %v55 = vsub.f32 2.0, %v54
    %v56 = vmul.f32 %v53, %v55
    %vm57 = vcmp.gt.f32.partialorder %v46, 20.0
    %v58 = vmul.f32 %v46, %v51
    %v59 = vmul.f32 %v58, %v56
    %v60 = vsel %vm57, %v46, %v59
    %s61 = sld [smem:[#allocation2 + $0x2]]
    %v62 = vstv %s61
    %v63 = vmul.f32 %v35, %v62
    %s64 = sld [smem:[#allocation2 + $0x3]]
    %v65 = vstv %s64
    %v66 = vmul.f32 %v36, %v65
    %v67 = vadd.f32 %v63, %v66
    %s68 = sld [smem:[#allocation2 + $0x5]]
    %v69 = vstv %s68
    %v70 = vadd.f32 %v67, %v69
    %v71 = vmin.f32 %v70, 20.0
    %v72 = vmul.f32 %v71, 1.442695
    %v73 = vpow.pop %v72
    %v74 = vadd.f32 %v73, 2.0
    %v75 = vmul.f32 %v73, %v74
    %v76 = vadd.f32 %v75, 2.0
    %v77 = vrcp.pop %v76
    %v78 = vmul.f32 %v76, %v77
    %v79 = vsub.f32 2.0, %v78
    %v80 = vmul.f32 %v77, %v79
    %vm81 = vcmp.gt.f32.partialorder %v70, 20.0
    %v82 = vmul.f32 %v70, %v75
    %v83 = vmul.f32 %v82, %v80
    %v84 = vsel %vm81, %v70, %v83
    %s85 = sld [smem:[#allocation2 + $0x6]]
    %v86 = vstv %s85
    %v87 = vmul.f32 %v60, %v86
    %s88 = sld [smem:[#allocation2 + $0x7]]
    %v89 = vstv %s88
    %v90 = vmul.f32 %v84, %v89
    %v91 = vadd.f32 %v87, %v90
    %s92 = sld [smem:[#allocation2 + $0x8]]
    %v93 = vstv %s92
    %v94 = vadd.f32 %v91, %v93
    %v95 = vmin.f32 %v94, 20.0
    %v96 = vmul.f32 %v95, 1.442695
    %v97 = vpow.pop %v96
    %v98 = vadd.f32 %v97, 2.0
    %v99 = vmul.f32 %v97, %v98
    %v100 = vadd.f32 %v99, 2.0
    %v101 = vrcp.pop %v100
    %v102 = vmul.f32 %v100, %v101
    %v103 = vsub.f32 2.0, %v102
    %v104 = vmul.f32 %v101, %v103
    %vm105 = vcmp.gt.f32.partialorder %v94, 20.0
    %v106 = vmul.f32 %v94, %v99
    %v107 = vmul.f32 %v106, %v104
    %v108 = vsel %vm105, %v94, %v107
    %109 = vst [vmem:[#allocation7] sm:$0x1] %v108
    // Predicated region
    $region18: #{tpu_custom_call.1} parent=1 // pred_check
      _
    $region19: #{tpu_custom_call.1} parent=1 // pred_check_branch
      %111 = sbr.rel (0) target = $region21
    $region20: #{tpu_custom_call.1} parent=1 // pred_region
      %s113 = ssub.s32 16, 16
      %114 = vsyncadd [#allocation4], %s113
      %s116 = sshll.u32 [#allocation7], 4
      %s117 = int_to_ptr.vmem [resolvable:$true] %s116
      %119 = dma.vmem_to_hbm [thread:$0]  %s117, 16, %s2, [#allocation4]
    $region21: #{tpu_custom_call.1} parent=1 // pred_fallthru
      _
    // Predicated region
    $region22: #{tpu_custom_call.1} parent=1 // pred_check
      _
    $region23: #{tpu_custom_call.1} parent=1 // pred_check_branch
      %121 = sbr.rel (0) target = $region25
    $region24: #{tpu_custom_call.1} parent=1 // pred_region
      %122 = dma.done [#allocation4], 16
    $region25: #{tpu_custom_call.1} parent=1 // pred_fallthru
      _
    %123 = vsyncpa [#allocation3], 1
    %124 = vsyncpa [#allocation4], 1
    %125 = vsyncpa [#allocation5], 1

</llo_original>
